<compile_context>
chip_gen: v7x
topology: tpu7x:2x2x1
jax: 0.10.0
libtpu: 0.0.40
codegen_flags: <defaults>
</compile_context>

<pallas_src>
import jax
import jax.numpy as jnp
from jax.experimental import pallas as pl
from jax.experimental.pallas import tpu as pltpu


def _pi_encoder_kernel(xT_ref, w1_ref, b1_ref, w2_ref, b2_ref, w3_ref, b3_ref, o_ref):
    """Transposed MLP: o^T = W3 @ relu(W2 @ relu(W1 @ x^T + b1) + b2) + b3.

    MXU-input dtype = weight dtype (f32 or bf16); accumulation/bias/ReLU are f32.
    """
    cdt = w1_ref.dtype

    # Layer 1: Linear + ReLU      (h_dim, tile_b)
    h = jnp.dot(w1_ref[...], xT_ref[...].astype(cdt),
                preferred_element_type=jnp.float32)
    h = jnp.maximum(h + b1_ref[...], 0.0)

    # Layer 2: Linear + ReLU      (h_dim, tile_b)
    h = jnp.dot(w2_ref[...], h.astype(cdt),
                preferred_element_type=jnp.float32)
    h = jnp.maximum(h + b2_ref[...], 0.0)

    # Layer 3: Linear (no act.)   (r_dim, tile_b)
    out = jnp.dot(w3_ref[...], h.astype(cdt),
                  preferred_element_type=jnp.float32)
    o_ref[...] = (out + b3_ref[...]).astype(o_ref.dtype)


def _default_num_steps():
    """2 grid steps on v7x (2 TensorCores/chip); 1 step on single-TC v5e/v6e."""
    try:
        kind = jax.devices()[0].device_kind.lower()
    except Exception:
        return 1
    return 2 if "v7" in kind else 1


# Cap on the per-step batch tile (lane axis).  A (16, 32768) f32 x-tile is 2 MiB
# (4 MiB double-buffered) -> comfortably inside the 32 MiB scoped-VMEM default on
# every generation, including v7x's smaller 64 MiB physical VMEM.
_MAX_TILE_B = 32768


def _choose_tile_b(B, num_steps):
    """Biggest lane-aligned (multiple-of-128) batch tile giving ~num_steps steps."""
    if B % 128 != 0:
        # TODO(synk): pad ragged batches up to a multiple of 128 instead of taking
        # one full-array block (fine for small B; huge ragged B would bloat VMEM).
        return B
    if num_steps > 1 and B % (128 * num_steps) == 0:
        tile = B // num_steps
    else:
        tile = B
    # VMEM safety cap (preserves divisibility of B and the 128-lane alignment).
    while tile > _MAX_TILE_B and tile % 2 == 0 and (tile // 2) % 128 == 0:
        tile //= 2
    return tile


def pi_encoder_forward(x, params, *, tile_b=None, compute_dtype=None,
                       out_dtype=None, num_steps=None):
    """x: (B, pi_dim).  params: torch-layout weights w{1,2,3}: (out, in), b: (out, 1).

    compute_dtype: optional MXU-input dtype (e.g. jnp.bfloat16) for the weights;
    x is cast inside the kernel, accumulation stays f32.
    out_dtype: output dtype (defaults to x.dtype, i.e. exact module semantics).
    """
    B, pi_dim = x.shape
    h_dim = params["w1"].shape[0]
    r_dim = params["w3"].shape[0]
    if out_dtype is None:
        out_dtype = x.dtype

    # Only weights are pre-cast; x stays in its HBM dtype (one read, in-kernel cast).
    if compute_dtype is not None:
        w1 = params["w1"].astype(compute_dtype)
        w2 = params["w2"].astype(compute_dtype)
        w3 = params["w3"].astype(compute_dtype)
    else:
        w1, w2, w3 = params["w1"], params["w2"], params["w3"]
    b1 = params["b1"].astype(jnp.float32)
    b2 = params["b2"].astype(jnp.float32)
    b3 = params["b3"].astype(jnp.float32)

    # Transposed layout: batch on the 128-lane axis.
    xT = x.T  # (pi_dim, B)

    if num_steps is None:
        num_steps = _default_num_steps()
    if tile_b is None:
        tile_b = _choose_tile_b(B, num_steps)
    if tile_b != B:
        assert B % tile_b == 0, "tile_b must divide B"
        assert tile_b % 128 == 0, "tile_b must be a multiple of 128 (lane axis)"
    grid = (B // tile_b,)

    x_isz = jnp.dtype(x.dtype).itemsize
    w_isz = jnp.dtype(w1.dtype).itemsize
    flops = 2 * B * (pi_dim * h_dim + h_dim * h_dim + h_dim * r_dim)
    bytes_accessed = (
        B * pi_dim * x_isz
        + (pi_dim * h_dim + h_dim * h_dim + h_dim * r_dim) * w_isz
        + (2 * h_dim + r_dim) * 4
        + B * r_dim * jnp.dtype(out_dtype).itemsize
    )
    cost = pl.CostEstimate(flops=flops, transcendentals=0,
                           bytes_accessed=bytes_accessed)

    # Weights / biases: constant index_map -> fetched once, VMEM-resident.
    full = lambda shape: pl.BlockSpec(shape, lambda i: (0,) * len(shape))

    outT = pl.pallas_call(
        _pi_encoder_kernel,
        out_shape=jax.ShapeDtypeStruct((r_dim, B), out_dtype),
        grid_spec=pltpu.PrefetchScalarGridSpec(
            num_scalar_prefetch=0,
            grid=grid,
            in_specs=[
                pl.BlockSpec((pi_dim, tile_b), lambda i: (0, i)),  # x^T tile
                full((h_dim, pi_dim)),                              # w1
                full((h_dim, 1)),                                   # b1
                full((h_dim, h_dim)),                               # w2
                full((h_dim, 1)),                                   # b2
                full((r_dim, h_dim)),                               # w3
                full((r_dim, 1)),                                   # b3
            ],
            out_specs=pl.BlockSpec((r_dim, tile_b), lambda i: (0, i)),
        ),
        compiler_params=pltpu.CompilerParams(
            dimension_semantics=("parallel",),
        ),
        cost_estimate=cost,
    )(xT, w1, b1, w2, b2, w3, b3)

    return outT.T  # (B, r_dim)


def init_params(key, pi_dim, h_dim, r_dim, dtype=jnp.float32):
    """Torch-Linear-style init; weights stored torch-native (out_dim, in_dim)."""
    ks = jax.random.split(key, 6)

    def lin(kw, kb, fan_in, fan_out):
        bound = 1.0 / float(fan_in) ** 0.5
        w = jax.random.uniform(kw, (fan_out, fan_in), dtype, -bound, bound)
        b = jax.random.uniform(kb, (fan_out, 1), dtype, -bound, bound)
        return w, b

    w1, b1 = lin(ks[0], ks[1], pi_dim, h_dim)
    w2, b2 = lin(ks[2], ks[3], h_dim, h_dim)
    w3, b3 = lin(ks[4], ks[5], h_dim, r_dim)
    return {"w1": w1, "b1": b1, "w2": w2, "b2": b2, "w3": w3, "b3": b3}


def reference_forward(x, p):
    h = jnp.maximum(x @ p["w1"].T + p["b1"].T, 0.0)
    h = jnp.maximum(h @ p["w2"].T + p["b2"].T, 0.0)
    return h @ p["w3"].T + p["b3"].T


if __name__ == "__main__":
    # Shapes implied by the module config: pi_dim, pi_enc_h_dim, pi_r_dim.
    B, pi_dim, h_dim, r_dim = 8, 16, 32, 16

    key = jax.random.PRNGKey(0)
    kx, kp = jax.random.split(key)
    x = jax.random.normal(kx, (B, pi_dim), dtype=jnp.float32)
    params = init_params(kp, pi_dim, h_dim, r_dim)

    # Small-batch path (single full-array block).
    out = jax.block_until_ready(pi_encoder_forward(x, params))
    ref = reference_forward(x, params)
    assert out.shape == (B, r_dim)
    assert jnp.allclose(out, ref, atol=1e-5, rtol=1e-5)

    # Lane-aligned batch: exercises the tiled path (1 step on v5e/v6e, 2 on v7x).
    B2 = 256
    x2 = jax.random.normal(jax.random.PRNGKey(1), (B2, pi_dim), dtype=jnp.float32)
    out2 = jax.block_until_ready(pi_encoder_forward(x2, params))
    ref2 = reference_forward(x2, params)
    assert out2.shape == (B2, r_dim)
    assert jnp.allclose(out2, ref2, atol=1e-4, rtol=1e-4)

    # bf16 MXU-input path: weights pre-cast, x cast in-kernel, f32 accumulation.
    out2_bf16 = jax.block_until_ready(
        pi_encoder_forward(x2, params, compute_dtype=jnp.bfloat16))
    assert jnp.allclose(out2_bf16, ref2, atol=1e-1, rtol=1e-1)

    print("KERNEL_OK")
</pallas_src>

<mosaic_0001>
module attributes {stable_mosaic.version = 11 : i64} {
  func.func @_pi_encoder_kernel(%arg0: i32, %arg1: memref<16x8xf32, #tpu.memory_space<vmem>>, %arg2: memref<32x16xf32, #tpu.memory_space<vmem>>, %arg3: memref<32x1xf32, #tpu.memory_space<vmem>>, %arg4: memref<32x32xf32, #tpu.memory_space<vmem>>, %arg5: memref<32x1xf32, #tpu.memory_space<vmem>>, %arg6: memref<16x32xf32, #tpu.memory_space<vmem>>, %arg7: memref<16x1xf32, #tpu.memory_space<vmem>>, %arg8: memref<16x8xf32, #tpu.memory_space<vmem>>) attributes {dimension_semantics = [#tpu.dimension_semantics<parallel>], iteration_bounds = array<i64: 1>, scalar_prefetch = 0 : i64, scratch_operands = 0 : i64, tpu.core_type = #tpu.core_type<tc>, window_params = [{transform_indices = @transform_0, window_bounds = array<i64: 16, 8>}, {pipeline_mode = #tpu.pipeline_mode<synchronous>, transform_indices = @transform_1, window_bounds = array<i64: 32, 16>}, {pipeline_mode = #tpu.pipeline_mode<synchronous>, transform_indices = @transform_2, window_bounds = array<i64: 32, 1>}, {pipeline_mode = #tpu.pipeline_mode<synchronous>, transform_indices = @transform_3, window_bounds = array<i64: 32, 32>}, {pipeline_mode = #tpu.pipeline_mode<synchronous>, transform_indices = @transform_4, window_bounds = array<i64: 32, 1>}, {pipeline_mode = #tpu.pipeline_mode<synchronous>, transform_indices = @transform_5, window_bounds = array<i64: 16, 32>}, {pipeline_mode = #tpu.pipeline_mode<synchronous>, transform_indices = @transform_6, window_bounds = array<i64: 16, 1>}, {transform_indices = @transform_7, window_bounds = array<i64: 16, 8>}]} {
    %c0 = arith.constant 0 : index
    %c0_0 = arith.constant 0 : index
    %0 = vector.load %arg2[%c0, %c0_0] : memref<32x16xf32, #tpu.memory_space<vmem>>, vector<32x16xf32>
    %c0_1 = arith.constant 0 : index
    %c0_2 = arith.constant 0 : index
    %1 = vector.load %arg1[%c0_1, %c0_2] : memref<16x8xf32, #tpu.memory_space<vmem>>, vector<16x8xf32>
    %cst = arith.constant dense<0.000000e+00> : vector<32x8xf32>
    %2 = tpu.matmul %0, %1, %cst {dimension_numbers = #tpu.dot_dimension_numbers<[1], [0], [0], [1], [0, 0, 1, 1], [], []>} : vector<32x16xf32>, vector<16x8xf32>, vector<32x8xf32> -> vector<32x8xf32>
    %c0_3 = arith.constant 0 : index
    %c0_4 = arith.constant 0 : index
    %3 = vector.load %arg3[%c0_3, %c0_4] : memref<32x1xf32, #tpu.memory_space<vmem>>, vector<32x1xf32>
    %4 = vector.broadcast %3 : vector<32x1xf32> to vector<32x8xf32>
    %5 = arith.addf %2, %4 : vector<32x8xf32>
    %cst_5 = arith.constant 0.000000e+00 : f32
    %6 = vector.broadcast %cst_5 : f32 to vector<32x8xf32>
    %7 = arith.maximumf %5, %6 : vector<32x8xf32>
    %c0_6 = arith.constant 0 : index
    %c0_7 = arith.constant 0 : index
    %8 = vector.load %arg4[%c0_6, %c0_7] : memref<32x32xf32, #tpu.memory_space<vmem>>, vector<32x32xf32>
    %cst_8 = arith.constant dense<0.000000e+00> : vector<32x8xf32>
    %9 = tpu.matmul %8, %7, %cst_8 {dimension_numbers = #tpu.dot_dimension_numbers<[1], [0], [0], [1], [0, 0, 1, 1], [], []>} : vector<32x32xf32>, vector<32x8xf32>, vector<32x8xf32> -> vector<32x8xf32>
    %c0_9 = arith.constant 0 : index
    %c0_10 = arith.constant 0 : index
    %10 = vector.load %arg5[%c0_9, %c0_10] : memref<32x1xf32, #tpu.memory_space<vmem>>, vector<32x1xf32>
    %11 = vector.broadcast %10 : vector<32x1xf32> to vector<32x8xf32>
    %12 = arith.addf %9, %11 : vector<32x8xf32>
    %cst_11 = arith.constant 0.000000e+00 : f32
    %13 = vector.broadcast %cst_11 : f32 to vector<32x8xf32>
    %14 = arith.maximumf %12, %13 : vector<32x8xf32>
    %c0_12 = arith.constant 0 : index
    %c0_13 = arith.constant 0 : index
    %15 = vector.load %arg6[%c0_12, %c0_13] : memref<16x32xf32, #tpu.memory_space<vmem>>, vector<16x32xf32>
    %cst_14 = arith.constant dense<0.000000e+00> : vector<16x8xf32>
    %16 = tpu.matmul %15, %14, %cst_14 {dimension_numbers = #tpu.dot_dimension_numbers<[1], [0], [0], [1], [0, 0, 1, 1], [], []>} : vector<16x32xf32>, vector<32x8xf32>, vector<16x8xf32> -> vector<16x8xf32>
    %c0_15 = arith.constant 0 : index
    %c0_16 = arith.constant 0 : index
    %17 = vector.load %arg7[%c0_15, %c0_16] : memref<16x1xf32, #tpu.memory_space<vmem>>, vector<16x1xf32>
    %18 = vector.broadcast %17 : vector<16x1xf32> to vector<16x8xf32>
    %19 = arith.addf %16, %18 : vector<16x8xf32>
    %c0_17 = arith.constant 0 : index
    %c0_18 = arith.constant 0 : index
    %20 = vector.load %arg8[%c0_17, %c0_18] : memref<16x8xf32, #tpu.memory_space<vmem>>, vector<16x8xf32>
    tpu.vector_store %arg8[%c0_17, %c0_18], %19 {strides = array<i32>} : memref<16x8xf32, #tpu.memory_space<vmem>>, vector<16x8xf32>,
    return
  }
  func.func @transform_0(%arg0: i32) -> (i32, i32) {
    %c0_i32 = arith.constant 0 : i32
    %c0_i32_0 = arith.constant 0 : i32
    return %c0_i32, %arg0 : i32, i32
  }
  func.func @transform_1(%arg0: i32) -> (i32, i32) {
    %c0_i32 = arith.constant 0 : i32
    %c0_i32_0 = arith.constant 0 : i32
    %c0_i32_1 = arith.constant 0 : i32
    return %c0_i32, %c0_i32_0 : i32, i32
  }
  func.func @transform_2(%arg0: i32) -> (i32, i32) {
    %c0_i32 = arith.constant 0 : i32
    %c0_i32_0 = arith.constant 0 : i32
    %c0_i32_1 = arith.constant 0 : i32
    return %c0_i32, %c0_i32_0 : i32, i32
  }
  func.func @transform_3(%arg0: i32) -> (i32, i32) {
    %c0_i32 = arith.constant 0 : i32
    %c0_i32_0 = arith.constant 0 : i32
    %c0_i32_1 = arith.constant 0 : i32
    return %c0_i32, %c0_i32_0 : i32, i32
  }
  func.func @transform_4(%arg0: i32) -> (i32, i32) {
    %c0_i32 = arith.constant 0 : i32
    %c0_i32_0 = arith.constant 0 : i32
    %c0_i32_1 = arith.constant 0 : i32
    return %c0_i32, %c0_i32_0 : i32, i32
  }
  func.func @transform_5(%arg0: i32) -> (i32, i32) {
    %c0_i32 = arith.constant 0 : i32
    %c0_i32_0 = arith.constant 0 : i32
    %c0_i32_1 = arith.constant 0 : i32
    return %c0_i32, %c0_i32_0 : i32, i32
  }
  func.func @transform_6(%arg0: i32) -> (i32, i32) {
    %c0_i32 = arith.constant 0 : i32
    %c0_i32_0 = arith.constant 0 : i32
    %c0_i32_1 = arith.constant 0 : i32
    return %c0_i32, %c0_i32_0 : i32, i32
  }
  func.func @transform_7(%arg0: i32) -> (i32, i32) {
    %c0_i32 = arith.constant 0 : i32
    %c0_i32_0 = arith.constant 0 : i32
    return %c0_i32, %arg0 : i32, i32
  }
}

</mosaic_0001>

<llo_original>
// kernel: tpu_custom_call.1
$region0: #{tpu_custom_call.1}
  #allocation0 [shape = 'u32[]', space=smem, size = 0x4, offset = 0x4, fixed_abs, tag = 'smem constant byte address 0x4 - core index']
  #allocation1 [shape = 'u32[144,128]{1,0:T(1,128)}', space=vmem, size = 0x12000, scoped, tag = 'internal scratch']
  %s0 = inlined_call_operand.vmem [shape: f32[16,8], index: 0, kind: input, shape index: {}]
  %s1 = inlined_call_operand.vmem [shape: f32[32,16], index: 1, kind: input, shape index: {}]
  %s2 = inlined_call_operand.vmem [shape: f32[32,1], index: 2, kind: input, shape index: {}]
  %s3 = inlined_call_operand.vmem [shape: f32[32,32], index: 3, kind: input, shape index: {}]
  %s4 = inlined_call_operand.vmem [shape: f32[32,1], index: 4, kind: input, shape index: {}]
  %s5 = inlined_call_operand.vmem [shape: f32[16,32], index: 5, kind: input, shape index: {}]
  %s6 = inlined_call_operand.vmem [shape: f32[16,1], index: 6, kind: input, shape index: {}]
  %s7 = inlined_call_operand.vmem [shape: f32[16,8], index: 7, kind: output, shape index: {}]
  %s8 = sld [smem:[#allocation0]]
  $region38: #{tpu_custom_call.1} parent=0
    _
  %s10 = ssub.s32 1, %s8
  %s11 = scalar_select 0, %s10, %s8
  // Predicated region
  $region2: #{tpu_custom_call.1} parent=0 // pred_check
    _
  $region3: #{tpu_custom_call.1} parent=0 // pred_check_branch
    %13 = sbr.rel (0) target = $region5
  $region4: #{tpu_custom_call.1} parent=0 // pred_region
    _
  $region5: #{tpu_custom_call.1} parent=0 // pred_fallthru
    _
  // Predicated region
  $region6: #{tpu_custom_call.1} parent=0 // pred_check
    _
  $region7: #{tpu_custom_call.1} parent=0 // pred_check_branch
    %15 = sbr.rel (0) target = $region9
  $region8: #{tpu_custom_call.1} parent=0 // pred_region
    _
  $region9: #{tpu_custom_call.1} parent=0 // pred_fallthru
    _
  // Predicated region
  $region10: #{tpu_custom_call.1} parent=0 // pred_check
    _
  $region11: #{tpu_custom_call.1} parent=0 // pred_check_branch
    %17 = sbr.rel (0) target = $region13
  $region12: #{tpu_custom_call.1} parent=0 // pred_region
    _
  $region13: #{tpu_custom_call.1} parent=0 // pred_fallthru
    _
  // Predicated region
  $region14: #{tpu_custom_call.1} parent=0 // pred_check
    _
  $region15: #{tpu_custom_call.1} parent=0 // pred_check_branch
    %19 = sbr.rel (0) target = $region17
  $region16: #{tpu_custom_call.1} parent=0 // pred_region
    _
  $region17: #{tpu_custom_call.1} parent=0 // pred_fallthru
    _
  // Predicated region
  $region18: #{tpu_custom_call.1} parent=0 // pred_check
    _
  $region19: #{tpu_custom_call.1} parent=0 // pred_check_branch
    %21 = sbr.rel (0) target = $region21
  $region20: #{tpu_custom_call.1} parent=0 // pred_region
    _
  $region21: #{tpu_custom_call.1} parent=0 // pred_fallthru
    _
  // Predicated region
  $region22: #{tpu_custom_call.1} parent=0 // pred_check
    _
  $region23: #{tpu_custom_call.1} parent=0 // pred_check_branch
    %23 = sbr.rel (0) target = $region25
  $region24: #{tpu_custom_call.1} parent=0 // pred_region
    _
  $region25: #{tpu_custom_call.1} parent=0 // pred_fallthru
    _
  // Predicated region
  $region26: #{tpu_custom_call.1} parent=0 // pred_check
    _
  $region27: #{tpu_custom_call.1} parent=0 // pred_check_branch
    %25 = sbr.rel (0) target = $region29
  $region28: #{tpu_custom_call.1} parent=0 // pred_region
    _
  $region29: #{tpu_custom_call.1} parent=0 // pred_fallthru
    _
  %v26 = vld [vmem:[%s1] sm:$0xff]
  %v27 = vld [vmem:[%s1 + $0x8] sm:$0xff]
  %v28 = vld [vmem:[%s1 + $0x10] sm:$0xff]
  %v29 = vld [vmem:[%s1 + $0x18] sm:$0xff]
  %v30 = vld [vmem:[%s0] sm:$0xff]
  %v31 = vld [vmem:[%s0 + $0x8] sm:$0xff]
  %v32 = vld [vmem:[%s2] sm:$0xff]
  %v33 = vld [vmem:[%s2 + $0x8] sm:$0xff]
  %v34 = vld [vmem:[%s2 + $0x10] sm:$0xff]
  %v35 = vld [vmem:[%s2 + $0x18] sm:$0xff]
  %37 = vset.pattern.permute.xlu0 0
  %38 = vperm.xlu0 %37, %v32
  %v39 = vpop.permute.xlu0 %38
  %42 = vset.pattern.permute.xlu0 0
  %43 = vperm.xlu0 %42, %v33
  %v44 = vpop.permute.xlu0 %43
  %47 = vset.pattern.permute.xlu0 0
  %48 = vperm.xlu0 %47, %v34
  %v49 = vpop.permute.xlu0 %48
  %52 = vset.pattern.permute.xlu0 0
  %53 = vperm.xlu0 %52, %v35
  %v54 = vpop.permute.xlu0 %53
  %vm56 = vcmask 130048
  %v58 = vsel %vm56, %v26, 0
  %v61 = vsel %vm56, %v27, 0
  %v64 = vsel %vm56, %v28, 0
  %v67 = vsel %vm56, %v29, 0
  %69 = vmatprep.subr.mxu0 0.0
  %70 = vmatpush1.msra.mxu0 %v30
  %71 = vmatprep.subr.mxu0 0.0
  %72 = vmatpush1.msra.mxu0 %v31
  %73 = vmatprep.subr.mxu0 0.0
  %74 = vmatpush1.msra.mxu0 0.0
  %75 = vmatprep.subr.mxu0 0.0
  %76 = vmatpush1.msra.mxu0 0.0
  %77 = vmatprep.subr.mxu0 0.0
  %78 = vmatpush1.msra.mxu0 0.0
  %79 = vmatprep.subr.mxu0 0.0
  %80 = vmatpush1.msra.mxu0 0.0
  %81 = vmatprep.subr.mxu0 0.0
  %82 = vmatpush1.msra.mxu0 0.0
  %83 = vmatprep.subr.mxu0 0.0
  %84 = vmatpush1.msra.mxu0 0.0
  %85 = vmatprep.subr.mxu0 0.0
  %86 = vmatpush1.msra.mxu0 0.0
  %87 = vmatprep.subr.mxu0 0.0
  %88 = vmatpush1.msra.mxu0 0.0
  %89 = vmatprep.subr.mxu0 0.0
  %90 = vmatpush1.msra.mxu0 0.0
  %91 = vmatprep.subr.mxu0 0.0
  %92 = vmatpush1.msra.mxu0 0.0
  %93 = vmatprep.subr.mxu0 0.0
  %94 = vmatpush1.msra.mxu0 0.0
  %95 = vmatprep.subr.mxu0 0.0
  %96 = vmatpush1.msra.mxu0 0.0
  %97 = vmatprep.subr.mxu0 0.0
  %98 = vmatpush1.msra.mxu0 0.0
  %99 = vmatprep.subr.mxu0 0.0
  %100 = vmatpush1.msra.mxu0 0.0
  %101 = vmatprep.subr.mxu0 0.0
  %102 = vmatpush1.msra.mxu0 0.0
  %103 = vmatprep.subr.mxu0 0.0
  %104 = vmatpush1.msra.mxu0 0.0
  %105 = vmatprep.subr.mxu0 0.0
  %106 = vmatpush1.msra.mxu0 0.0
  %107 = vmatprep.subr.mxu0 0.0
  %108 = vmatpush1.msra.mxu0 0.0
  %109 = vmatprep.subr.mxu0 0.0
  %110 = vmatpush1.msra.mxu0 0.0
  %111 = vmatprep.subr.mxu0 0.0
  %112 = vmatpush1.msra.mxu0 0.0
  %113 = vmatprep.subr.mxu0 0.0
  %114 = vmatpush1.msra.mxu0 0.0
  %115 = vmatprep.subr.mxu0 0.0
  %116 = vmatpush1.msra.mxu0 0.0
  %117 = vmatprep.subr.mxu0 0.0
  %118 = vmatpush1.msra.mxu0 0.0
  %119 = vmatprep.subr.mxu0 0.0
  %120 = vmatpush1.msra.mxu0 0.0
  %121 = vmatprep.subr.mxu0 0.0
  %122 = vmatpush1.msra.mxu0 0.0
  %123 = vmatprep.subr.mxu0 0.0
  %124 = vmatpush1.msra.mxu0 0.0
  %125 = vmatprep.subr.mxu0 0.0
  %126 = vmatpush1.msra.mxu0 0.0
  %127 = vmatprep.subr.mxu0 0.0
  %128 = vmatpush1.msra.mxu0 0.0
  %129 = vmatprep.subr.mxu0 0.0
  %130 = vmatpush1.msra.mxu0 0.0
  %131 = vmatprep.subr.mxu0 0.0
  %132 = vmatpush1.msra.mxu0 0.0
  %133 = vmatprep.mubr.f32.mxu0 0.0
  %134 = vmatmul.mubr.f32.gmra.mrb[0].mxu0 %v58
  %v135 = vpop.f32.mrb[0].mxu0
  %v136 = vadd.f32 %v39, %v135
  %v137 = vpop.f32.mrb[0].mxu0
  %138 = vmatprep.mubr.f32.mxu0 0.0
  %139 = vmatmul.mubr.f32.gmra.mrb[0].mxu0 %v61
  %v140 = vpop.f32.mrb[0].mxu0
  %v141 = vadd.f32 %v44, %v140
  %v142 = vpop.f32.mrb[0].mxu0
  %143 = vmatprep.mubr.f32.mxu0 0.0
  %144 = vmatmul.mubr.f32.gmra.mrb[0].mxu0 %v64
  %v145 = vpop.f32.mrb[0].mxu0
  %v146 = vadd.f32 %v49, %v145
  %v147 = vpop.f32.mrb[0].mxu0
  %148 = vmatprep.mubr.f32.mxu0 0.0
  %149 = vmatmul.mubr.f32.gmra.mrb[0].mxu0 %v67
  %v150 = vpop.f32.mrb[0].mxu0
  %v151 = vadd.f32 %v54, %v150
  %v152 = vpop.f32.mrb[0].mxu0
  %153 = vdwg.mxu0
  %v154 = vmax.f32 %v136, 0.0
  %v155 = vmax.f32 %v141, 0.0
  %v156 = vmax.f32 %v146, 0.0
  %v157 = vmax.f32 %v151, 0.0
  %v158 = vld [vmem:[%s3] sm:$0xff]
  %v159 = vld [vmem:[%s3 + $0x8] sm:$0xff]
  %v160 = vld [vmem:[%s3 + $0x10] sm:$0xff]
  %v161 = vld [vmem:[%s3 + $0x18] sm:$0xff]
  %v162 = vld [vmem:[%s4] sm:$0xff]
  %v163 = vld [vmem:[%s4 + $0x8] sm:$0xff]
  %v164 = vld [vmem:[%s4 + $0x10] sm:$0xff]
  %v165 = vld [vmem:[%s4 + $0x18] sm:$0xff]
  %167 = vset.pattern.permute.xlu0 0
  %168 = vperm.xlu0 %167, %v162
  %v169 = vpop.permute.xlu0 %168
  %172 = vset.pattern.permute.xlu0 0
  %173 = vperm.xlu0 %172, %v163
  %v174 = vpop.permute.xlu0 %173
  %177 = vset.pattern.permute.xlu0 0
  %178 = vperm.xlu0 %177, %v164
  %v179 = vpop.permute.xlu0 %178
  %182 = vset.pattern.permute.xlu0 0
  %183 = vperm.xlu0 %182, %v165
  %v184 = vpop.permute.xlu0 %183
  %vm186 = vcmask 261120
  %v188 = vsel %vm186, %v158, 0
  %v191 = vsel %vm186, %v159, 0
  %v194 = vsel %vm186, %v160, 0
  %v197 = vsel %vm186, %v161, 0
  %199 = vmatprep.subr.mxu0 0.0
  %200 = vmatpush1.msra.mxu0 %v154
  %201 = vmatprep.subr.mxu0 0.0
  %202 = vmatpush1.msra.mxu0 %v155
  %203 = vmatprep.subr.mxu0 0.0
  %204 = vmatpush1.msra.mxu0 %v156
  %205 = vmatprep.subr.mxu0 0.0
  %206 = vmatpush1.msra.mxu0 %v157
  %207 = vmatprep.subr.mxu0 0.0
  %208 = vmatpush1.msra.mxu0 0.0
  %209 = vmatprep.subr.mxu0 0.0
  %210 = vmatpush1.msra.mxu0 0.0
  %211 = vmatprep.subr.mxu0 0.0
  %212 = vmatpush1.msra.mxu0 0.0
  %213 = vmatprep.subr.mxu0 0.0
  %214 = vmatpush1.msra.mxu0 0.0
  %215 = vmatprep.subr.mxu0 0.0
  %216 = vmatpush1.msra.mxu0 0.0
  %217 = vmatprep.subr.mxu0 0.0
  %218 = vmatpush1.msra.mxu0 0.0
  %219 = vmatprep.subr.mxu0 0.0
  %220 = vmatpush1.msra.mxu0 0.0
  %221 = vmatprep.subr.mxu0 0.0
  %222 = vmatpush1.msra.mxu0 0.0
  %223 = vmatprep.subr.mxu0 0.0
  %224 = vmatpush1.msra.mxu0 0.0
  %225 = vmatprep.subr.mxu0 0.0
  %226 = vmatpush1.msra.mxu0 0.0
  %227 = vmatprep.subr.mxu0 0.0
  %228 = vmatpush1.msra.mxu0 0.0
  %229 = vmatprep.subr.mxu0 0.0
  %230 = vmatpush1.msra.mxu0 0.0
  %231 = vmatprep.subr.mxu0 0.0
  %232 = vmatpush1.msra.mxu0 0.0
  %233 = vmatprep.subr.mxu0 0.0
  %234 = vmatpush1.msra.mxu0 0.0
  %235 = vmatprep.subr.mxu0 0.0
  %236 = vmatpush1.msra.mxu0 0.0
  %237 = vmatprep.subr.mxu0 0.0
  %238 = vmatpush1.msra.mxu0 0.0
  %239 = vmatprep.subr.mxu0 0.0
  %240 = vmatpush1.msra.mxu0 0.0
  %241 = vmatprep.subr.mxu0 0.0
  %242 = vmatpush1.msra.mxu0 0.0
  %243 = vmatprep.subr.mxu0 0.0
  %244 = vmatpush1.msra.mxu0 0.0
  %245 = vmatprep.subr.mxu0 0.0
  %246 = vmatpush1.msra.mxu0 0.0
  %247 = vmatprep.subr.mxu0 0.0
  %248 = vmatpush1.msra.mxu0 0.0
  %249 = vmatprep.subr.mxu0 0.0
  %250 = vmatpush1.msra.mxu0 0.0
  %251 = vmatprep.subr.mxu0 0.0
  %252 = vmatpush1.msra.mxu0 0.0
  %253 = vmatprep.subr.mxu0 0.0
  %254 = vmatpush1.msra.mxu0 0.0
  %255 = vmatprep.subr.mxu0 0.0
  %256 = vmatpush1.msra.mxu0 0.0
  %257 = vmatprep.subr.mxu0 0.0
  %258 = vmatpush1.msra.mxu0 0.0
  %259 = vmatprep.subr.mxu0 0.0
  %260 = vmatpush1.msra.mxu0 0.0
  %261 = vmatprep.subr.mxu0 0.0
  %262 = vmatpush1.msra.mxu0 0.0
  %263 = vmatprep.mubr.f32.mxu0 0.0
  %264 = vmatmul.mubr.f32.gmra.mrb[0].mxu0 %v188
  %v265 = vpop.f32.mrb[0].mxu0
  %v266 = vadd.f32 %v169, %v265
  %v267 = vpop.f32.mrb[0].mxu0
  %268 = vmatprep.mubr.f32.mxu0 0.0
  %269 = vmatmul.mubr.f32.gmra.mrb[0].mxu0 %v191
  %v270 = vpop.f32.mrb[0].mxu0
  %v271 = vadd.f32 %v174, %v270
  %v272 = vpop.f32.mrb[0].mxu0
  %273 = vmatprep.mubr.f32.mxu0 0.0
  %274 = vmatmul.mubr.f32.gmra.mrb[0].mxu0 %v194
  %v275 = vpop.f32.mrb[0].mxu0
  %v276 = vadd.f32 %v179, %v275
  %v277 = vpop.f32.mrb[0].mxu0
  %278 = vmatprep.mubr.f32.mxu0 0.0
  %279 = vmatmul.mubr.f32.gmra.mrb[0].mxu0 %v197
  %v280 = vpop.f32.mrb[0].mxu0
  %v281 = vadd.f32 %v184, %v280
  %v282 = vpop.f32.mrb[0].mxu0
  %283 = vdwg.mxu0
  %v284 = vmax.f32 %v266, 0.0
  %v285 = vmax.f32 %v271, 0.0
  %v286 = vmax.f32 %v276, 0.0
  %v287 = vmax.f32 %v281, 0.0
  %v288 = vld [vmem:[%s5] sm:$0xff]
  %v289 = vld [vmem:[%s5 + $0x8] sm:$0xff]
  %v290 = vld [vmem:[%s6] sm:$0xff]
  %v291 = vld [vmem:[%s6 + $0x8] sm:$0xff]
  %293 = vset.pattern.permute.xlu0 0
  %294 = vperm.xlu0 %293, %v290
  %v295 = vpop.permute.xlu0 %294
  %298 = vset.pattern.permute.xlu0 0
  %299 = vperm.xlu0 %298, %v291
  %v300 = vpop.permute.xlu0 %299
  %v303 = vsel %vm186, %v288, 0
  %v306 = vsel %vm186, %v289, 0
  %308 = vmatprep.subr.mxu0 0.0
  %309 = vmatpush1.msra.mxu0 %v284
  %310 = vmatprep.subr.mxu0 0.0
  %311 = vmatpush1.msra.mxu0 %v285
  %312 = vmatprep.subr.mxu0 0.0
  %313 = vmatpush1.msra.mxu0 %v286
  %314 = vmatprep.subr.mxu0 0.0
  %315 = vmatpush1.msra.mxu0 %v287
  %316 = vmatprep.subr.mxu0 0.0
  %317 = vmatpush1.msra.mxu0 0.0
  %318 = vmatprep.subr.mxu0 0.0
  %319 = vmatpush1.msra.mxu0 0.0
  %320 = vmatprep.subr.mxu0 0.0
  %321 = vmatpush1.msra.mxu0 0.0
  %322 = vmatprep.subr.mxu0 0.0
  %323 = vmatpush1.msra.mxu0 0.0
  %324 = vmatprep.subr.mxu0 0.0
  %325 = vmatpush1.msra.mxu0 0.0
  %326 = vmatprep.subr.mxu0 0.0
  %327 = vmatpush1.msra.mxu0 0.0
  %328 = vmatprep.subr.mxu0 0.0
  %329 = vmatpush1.msra.mxu0 0.0
  %330 = vmatprep.subr.mxu0 0.0
  %331 = vmatpush1.msra.mxu0 0.0
  %332 = vmatprep.subr.mxu0 0.0
  %333 = vmatpush1.msra.mxu0 0.0
  %334 = vmatprep.subr.mxu0 0.0
  %335 = vmatpush1.msra.mxu0 0.0
  %336 = vmatprep.subr.mxu0 0.0
  %337 = vmatpush1.msra.mxu0 0.0
  %338 = vmatprep.subr.mxu0 0.0
  %339 = vmatpush1.msra.mxu0 0.0
  %340 = vmatprep.subr.mxu0 0.0
  %341 = vmatpush1.msra.mxu0 0.0
  %342 = vmatprep.subr.mxu0 0.0
  %343 = vmatpush1.msra.mxu0 0.0
  %344 = vmatprep.subr.mxu0 0.0
  %345 = vmatpush1.msra.mxu0 0.0
  %346 = vmatprep.subr.mxu0 0.0
  %347 = vmatpush1.msra.mxu0 0.0
  %348 = vmatprep.subr.mxu0 0.0
  %349 = vmatpush1.msra.mxu0 0.0
  %350 = vmatprep.subr.mxu0 0.0
  %351 = vmatpush1.msra.mxu0 0.0
  %352 = vmatprep.subr.mxu0 0.0
  %353 = vmatpush1.msra.mxu0 0.0
  %354 = vmatprep.subr.mxu0 0.0
  %355 = vmatpush1.msra.mxu0 0.0
  %356 = vmatprep.subr.mxu0 0.0
  %357 = vmatpush1.msra.mxu0 0.0
  %358 = vmatprep.subr.mxu0 0.0
  %359 = vmatpush1.msra.mxu0 0.0
  %360 = vmatprep.subr.mxu0 0.0
  %361 = vmatpush1.msra.mxu0 0.0
  %362 = vmatprep.subr.mxu0 0.0
  %363 = vmatpush1.msra.mxu0 0.0
  %364 = vmatprep.subr.mxu0 0.0
  %365 = vmatpush1.msra.mxu0 0.0
  %366 = vmatprep.subr.mxu0 0.0
  %367 = vmatpush1.msra.mxu0 0.0
  %368 = vmatprep.subr.mxu0 0.0
  %369 = vmatpush1.msra.mxu0 0.0
  %370 = vmatprep.subr.mxu0 0.0
  %371 = vmatpush1.msra.mxu0 0.0
  %372 = vmatprep.mubr.f32.mxu0 0.0
  %373 = vmatmul.mubr.f32.gmra.mrb[0].mxu0 %v303
  %v374 = vpop.f32.mrb[0].mxu0
  %v375 = vadd.f32 %v295, %v374
  %v376 = vpop.f32.mrb[0].mxu0
  %377 = vmatprep.mubr.f32.mxu0 0.0
  %378 = vmatmul.mubr.f32.gmra.mrb[0].mxu0 %v306
  %v379 = vpop.f32.mrb[0].mxu0
  %v380 = vadd.f32 %v300, %v379
  %v381 = vpop.f32.mrb[0].mxu0
  %382 = vdwg.mxu0
  %vm383 = vcmask 64512
  %384 = vst.msk [vmem:[%s7] sm:$0xff] %vm383, %v375
  %385 = vst.msk [vmem:[%s7 + $0x8] sm:$0xff] %vm383, %v380
  // Predicated region
  $region30: #{tpu_custom_call.1} parent=0 // pred_check
    _
  $region31: #{tpu_custom_call.1} parent=0 // pred_check_branch
    %387 = sbr.rel (0) target = $region33
  $region32: #{tpu_custom_call.1} parent=0 // pred_region
    _
  $region33: #{tpu_custom_call.1} parent=0 // pred_fallthru
    _
  // Predicated region
  $region34: #{tpu_custom_call.1} parent=0 // pred_check
    _
  $region35: #{tpu_custom_call.1} parent=0 // pred_check_branch
    %389 = sbr.rel (0) target = $region37
  $region36: #{tpu_custom_call.1} parent=0 // pred_region
    _
  $region37: #{tpu_custom_call.1} parent=0 // pred_fallthru
    _

</llo_original>
